<compile_context>
chip_gen: v6e
topology: v6e:2x2x1
jax: 0.10.0
libtpu: 0.0.40
codegen_flags: <defaults>
</compile_context>

<pallas_src>
import functools

import jax
import jax.numpy as jnp
import numpy as np
from jax.experimental import pallas as pl
from jax.experimental.pallas import tpu as pltpu


# ---------------------------------------------------------------------------
# Deterministic orthonormal initializer (matches nn.Linear's (hidden, input)
# weight shape; correct for both out_dim >= in_dim and out_dim < in_dim).
# ---------------------------------------------------------------------------
def orthonormal_initializer(out_dim: int, in_dim: int, seed: int = 0) -> np.ndarray:
    rng = np.random.RandomState(seed)
    a = rng.randn(out_dim, in_dim).astype(np.float64)
    if out_dim >= in_dim:
        q, r = np.linalg.qr(a)              # (out_dim, in_dim)
        w = q * np.sign(np.diag(r))
    else:
        q, r = np.linalg.qr(a.T)            # (in_dim, out_dim)
        w = (q * np.sign(np.diag(r))).T
    return np.ascontiguousarray(w).astype(np.float32)


def _round_up(x: int, m: int) -> int:
    return (x + m - 1) // m * m


# ---------------------------------------------------------------------------
# One-time parameter preparation (outside the hot path).
#   w_out_in : (hidden, input) f32   -- nn.Linear weight
#   b        : (hidden,)       f32
# Returns (w_pad, b_pad): W in (K, N) layout, bf16, padded; bias (1, N) f32.
# ---------------------------------------------------------------------------
_SINGLE_K_MAX = 2048      # up to this K, use a single K step (no K padding)
_TK_BIG = 1024            # K tile when K is tiled
_W_RESIDENT_BUDGET = 6 * 2**20   # bf16 whole-W budget (v7x-safe)


def prepare_mlp_params(w_out_in: np.ndarray, b: np.ndarray):
    n, k = w_out_in.shape
    assert b.shape == (n,)

    k_pad = k if k <= _SINGLE_K_MAX else _round_up(k, _TK_BIG)
    n_pad = 128 if n <= 128 else _round_up(n, 256)   # lane-dense, 256-wide MXU

    w_kn = np.ascontiguousarray(w_out_in.T)          # (K, N)
    w_full = np.zeros((k_pad, n_pad), dtype=np.float32)
    w_full[:k, :n] = w_kn
    b_full = np.zeros((1, n_pad), dtype=np.float32)
    b_full[0, :n] = b

    w_pad = jnp.asarray(w_full, dtype=jnp.bfloat16)  # stored once, bf16, padded
    b_pad = jnp.asarray(b_full, dtype=jnp.float32)
    return w_pad, b_pad


# ---------------------------------------------------------------------------
# Pallas kernel: grid = (M tiles, N tiles, K tiles), K (reduction) last.
#   x_ref  : (tm, tk)  input rows in their native dtype (cast to bf16 here)
#   w_ref  : (tk, tn)  bf16 weight, (K, N) layout
#   b_ref  : (1,  tn)  f32 bias
#   o_ref  : (tm, tn)  output tile
#   acc_ref: (tm, tn)  f32 accumulator, resident across the K axis
# ---------------------------------------------------------------------------
def mlp_kernel(x_ref, w_ref, b_ref, o_ref, acc_ref, *, activation: str):
    kk = pl.program_id(2)

    @pl.when(kk == 0)
    def _():
        acc_ref[...] = jnp.zeros_like(acc_ref)

    acc_ref[...] += jnp.dot(x_ref[...].astype(jnp.bfloat16), w_ref[...],
                            preferred_element_type=jnp.float32)

    @pl.when(kk == pl.num_programs(2) - 1)
    def _():
        y = acc_ref[...] + b_ref[...]          # bias add in f32
        if activation == "relu":
            y = jnp.maximum(y, 0.0)
        elif activation == "tanh":
            y = jnp.tanh(y)
        # "identity": module default (lambda x: x)
        o_ref[...] = y.astype(o_ref.dtype)


def _choose_tm(m: int) -> int:
    if m <= 128:
        return _round_up(max(m, 1), 16)        # bf16 packs 16 rows / vreg group
    # minimize M padding; prefer larger tile on ties
    return min((512, 256, 128), key=lambda c: (_round_up(m, c) - m, -c))


@functools.partial(jax.jit, static_argnames=("activation", "n_out"))
def mlp_layer_apply(x: jax.Array, w_pad: jax.Array, b_pad: jax.Array,
                    activation: str = "identity", n_out: int = 0) -> jax.Array:
    """y = activation(x @ W.T + b) using pre-prepared (padded, bf16) W."""
    *lead, k = x.shape
    k_pad, n_pad = w_pad.shape
    assert k <= k_pad and b_pad.shape == (1, n_pad)
    n = n_out if n_out > 0 else n_pad
    out_dtype = x.dtype

    x2d = x.reshape(-1, k)
    m = x2d.shape[0]

    # ---- tile sizing --------------------------------------------------------
    tk = k_pad if k_pad <= _SINGLE_K_MAX else _TK_BIG
    if (tk == k_pad and k_pad * n_pad * 2 <= _W_RESIDENT_BUDGET and n_pad <= 2048):
        tn = n_pad                              # whole W resident in VMEM
    elif n_pad % 512 == 0:
        tn = 512
    elif n_pad % 256 == 0:
        tn = 256
    else:
        tn = n_pad                              # n_pad == 128

    tm = _choose_tm(m)
    m_pad = _round_up(m, tm)

    # Megacore / v7x: make sure the parallel axes have >= 2 steps when M allows.
    if (m_pad // tm) * (n_pad // tn) < 2 and m > 128 and tm >= 256:
        tm = max(128, tm // 2)
        m_pad = _round_up(m, tm)

    # Zero-pad x only if needed (no cast; single-K-step path never pads K).
    if (m_pad, k_pad) != (m, k):
        x2d = jnp.pad(x2d, ((0, m_pad - m), (0, k_pad - k)))

    grid = (m_pad // tm, n_pad // tn, k_pad // tk)

    # VMEM footprint -> scoped limit (capped so it is safe on v7x's 64 MiB).
    x_bytes = jnp.dtype(x2d.dtype).itemsize
    o_bytes = jnp.dtype(out_dtype).itemsize
    est = (2 * tm * tk * x_bytes + 2 * tk * tn * 2 + 2 * tn * 4
           + 2 * tm * tn * o_bytes + tm * tn * 4)
    vmem_limit = int(min(max(int(est * 1.25), 32 * 2**20), 56 * 2**20))

    # Deeper input buffering only when the K axis is long and tiles are small.
    deep = (grid[2] >= 4) and (tm * tk * x_bytes + tk * tn * 2) <= (1 << 20)
    pm = pl.Buffered(3) if deep else None

    x_spec = pl.BlockSpec((tm, tk), lambda i, j, kk: (i, kk), pipeline_mode=pm)
    w_spec = pl.BlockSpec((tk, tn), lambda i, j, kk: (kk, j), pipeline_mode=pm)
    b_spec = pl.BlockSpec((1, tn), lambda i, j, kk: (0, j))

    out = pl.pallas_call(
        functools.partial(mlp_kernel, activation=activation),
        out_shape=jax.ShapeDtypeStruct((m_pad, n_pad), out_dtype),
        grid_spec=pltpu.PrefetchScalarGridSpec(
            num_scalar_prefetch=0,
            grid=grid,
            in_specs=[x_spec, w_spec, b_spec],
            out_specs=pl.BlockSpec((tm, tn), lambda i, j, kk: (i, j)),
            scratch_shapes=[pltpu.VMEM((tm, tn), jnp.float32)],
        ),
        compiler_params=pltpu.CompilerParams(
            dimension_semantics=("parallel", "parallel", "arbitrary"),
            vmem_limit_bytes=vmem_limit),
    )(x2d, w_pad, b_pad)

    return out[:m, :n].reshape(*lead, n)


if __name__ == "__main__":
    # Small shapes consistent with an MLP over a sequence of token features.
    batch, seq, input_size, hidden_size = 2, 8, 32, 128

    key = jax.random.PRNGKey(0)
    x = jax.random.normal(key, (batch, seq, input_size), dtype=jnp.float32)

    # Parameter init mirroring MLPLayer.__init__ (nn.Linear weight is
    # (hidden, input)); preparation (transpose / bf16 cast / pad) runs ONCE.
    w_np = orthonormal_initializer(hidden_size, input_size, seed=0)
    b_np = np.zeros(hidden_size, dtype=np.float32)
    w_pad, b_pad = prepare_mlp_params(w_np, b_np)

    # Module default activation is identity; also exercise relu / tanh.
    y_id = mlp_layer_apply(x, w_pad, b_pad, activation="identity", n_out=hidden_size)
    y_relu = mlp_layer_apply(x, w_pad, b_pad, activation="relu", n_out=hidden_size)
    y_tanh = mlp_layer_apply(x, w_pad, b_pad, activation="tanh", n_out=hidden_size)
    jax.block_until_ready((y_id, y_relu, y_tanh))

    # Reference 1: same numerics as the kernel (bf16 operands, f32 accumulate).
    w_kn = jnp.asarray(w_np.T)                     # (K, N) f32
    x_bf = x.astype(jnp.bfloat16)
    w_bf = w_kn.astype(jnp.bfloat16)
    y_ref_bf = jnp.einsum("bsk,kn->bsn", x_bf, w_bf,
                          preferred_element_type=jnp.float32) + jnp.asarray(b_np)
    # Reference 2: full-f32 module semantics (looser tolerance for bf16 cast).
    y_ref_f32 = jnp.einsum("bsk,kn->bsn", x, w_kn) + jnp.asarray(b_np)

    assert y_id.shape == (batch, seq, hidden_size)
    np.testing.assert_allclose(np.asarray(y_id), np.asarray(y_ref_bf),
                               rtol=1e-4, atol=1e-4)
    np.testing.assert_allclose(np.asarray(y_id), np.asarray(y_ref_f32),
                               rtol=5e-2, atol=5e-2)
    np.testing.assert_allclose(np.asarray(y_relu),
                               np.maximum(np.asarray(y_ref_bf), 0.0),
                               rtol=1e-4, atol=1e-4)
    np.testing.assert_allclose(np.asarray(y_tanh),
                               np.tanh(np.asarray(y_ref_bf)),
                               rtol=1e-4, atol=1e-4)

    print("KERNEL_OK")
</pallas_src>

<mosaic_0001>
module attributes {stable_mosaic.version = 11 : i64} {
  func.func @mlp_kernel(%arg0: i32, %arg1: i32, %arg2: i32, %arg3: memref<16x32xf32, #tpu.memory_space<vmem>>, %arg4: memref<32x128xbf16, #tpu.memory_space<vmem>>, %arg5: memref<1x128xf32, #tpu.memory_space<vmem>>, %arg6: memref<16x128xf32, #tpu.memory_space<vmem>>, %arg7: memref<16x128xf32, #tpu.memory_space<vmem>>) attributes {dimension_semantics = [#tpu.dimension_semantics<parallel>, #tpu.dimension_semantics<parallel>, #tpu.dimension_semantics<arbitrary>], iteration_bounds = array<i64: 1, 1, 1>, scalar_prefetch = 0 : i64, scratch_operands = 1 : i64, tpu.core_type = #tpu.core_type<tc>, window_params = [{transform_indices = @transform_0, window_bounds = array<i64: 16, 32>}, {transform_indices = @transform_1, window_bounds = array<i64: 32, 128>}, {transform_indices = @transform_2, window_bounds = array<i64: 1, 128>}, {transform_indices = @transform_3, window_bounds = array<i64: 16, 128>}]} {
    %c0_i32 = arith.constant 0 : i32
    %0 = arith.cmpi eq, %arg2, %c0_i32 : i32
    %1 = arith.extui %0 : i1 to i32
    %c0_i32_0 = arith.constant 0 : i32
    %2 = arith.cmpi ne, %1, %c0_i32_0 : i32
    scf.if %2 {
      %cst_10 = arith.constant 0.000000e+00 : f32
      %13 = vector.broadcast %cst_10 : f32 to vector<16x128xf32>
      %c0_11 = arith.constant 0 : index
      %c0_12 = arith.constant 0 : index
      %14 = vector.load %arg7[%c0_11, %c0_12] : memref<16x128xf32, #tpu.memory_space<vmem>>, vector<16x128xf32>
      tpu.vector_store %arg7[%c0_11, %c0_12], %13 {strides = array<i32>} : memref<16x128xf32, #tpu.memory_space<vmem>>, vector<16x128xf32>,
    } else {
    }
    %c0 = arith.constant 0 : index
    %c0_1 = arith.constant 0 : index
    %3 = vector.load %arg7[%c0, %c0_1] : memref<16x128xf32, #tpu.memory_space<vmem>>, vector<16x128xf32>
    %c0_2 = arith.constant 0 : index
    %c0_3 = arith.constant 0 : index
    %4 = vector.load %arg3[%c0_2, %c0_3] : memref<16x32xf32, #tpu.memory_space<vmem>>, vector<16x32xf32>
    %5 = arith.truncf %4 : vector<16x32xf32> to vector<16x32xbf16>
    %c0_4 = arith.constant 0 : index
    %c0_5 = arith.constant 0 : index
    %6 = vector.load %arg4[%c0_4, %c0_5] : memref<32x128xbf16, #tpu.memory_space<vmem>>, vector<32x128xbf16>
    %cst = arith.constant dense<0.000000e+00> : vector<16x128xf32>
    %7 = tpu.matmul %5, %6, %cst {dimension_numbers = #tpu.dot_dimension_numbers<[1], [0], [0], [1], [0, 0, 1, 1], [], []>} : vector<16x32xbf16>, vector<32x128xbf16>, vector<16x128xf32> -> vector<16x128xf32>
    %8 = arith.addf %3, %7 : vector<16x128xf32>
    %c0_6 = arith.constant 0 : index
    %c0_7 = arith.constant 0 : index
    %9 = vector.load %arg7[%c0_6, %c0_7] : memref<16x128xf32, #tpu.memory_space<vmem>>, vector<16x128xf32>
    tpu.vector_store %arg7[%c0_6, %c0_7], %8 {strides = array<i32>} : memref<16x128xf32, #tpu.memory_space<vmem>>, vector<16x128xf32>,
    %c0_i32_8 = arith.constant 0 : i32
    %10 = arith.cmpi eq, %arg2, %c0_i32_8 : i32
    %11 = arith.extui %10 : i1 to i32
    %c0_i32_9 = arith.constant 0 : i32
    %12 = arith.cmpi ne, %11, %c0_i32_9 : i32
    scf.if %12 {
      %c0_10 = arith.constant 0 : index
      %c0_11 = arith.constant 0 : index
      %13 = vector.load %arg7[%c0_10, %c0_11] : memref<16x128xf32, #tpu.memory_space<vmem>>, vector<16x128xf32>
      %c0_12 = arith.constant 0 : index
      %c0_13 = arith.constant 0 : index
      %14 = vector.load %arg5[%c0_12, %c0_13] : memref<1x128xf32, #tpu.memory_space<vmem>>, vector<1x128xf32>
      %15 = vector.broadcast %14 : vector<1x128xf32> to vector<16x128xf32>
      %16 = arith.addf %13, %15 : vector<16x128xf32>
      %c0_14 = arith.constant 0 : index
      %c0_15 = arith.constant 0 : index
      %17 = vector.load %arg6[%c0_14, %c0_15] : memref<16x128xf32, #tpu.memory_space<vmem>>, vector<16x128xf32>
      tpu.vector_store %arg6[%c0_14, %c0_15], %16 {strides = array<i32>} : memref<16x128xf32, #tpu.memory_space<vmem>>, vector<16x128xf32>,
    } else {
    }
    return
  }
  func.func @transform_0(%arg0: i32, %arg1: i32, %arg2: i32) -> (i32, i32) {
    %c0_i32 = arith.constant 0 : i32
    return %arg0, %arg2 : i32, i32
  }
  func.func @transform_1(%arg0: i32, %arg1: i32, %arg2: i32) -> (i32, i32) {
    %c0_i32 = arith.constant 0 : i32
    return %arg2, %arg1 : i32, i32
  }
  func.func @transform_2(%arg0: i32, %arg1: i32, %arg2: i32) -> (i32, i32) {
    %c0_i32 = arith.constant 0 : i32
    %c0_i32_0 = arith.constant 0 : i32
    return %c0_i32, %arg1 : i32, i32
  }
  func.func @transform_3(%arg0: i32, %arg1: i32, %arg2: i32) -> (i32, i32) {
    %c0_i32 = arith.constant 0 : i32
    return %arg0, %arg1 : i32, i32
  }
}

</mosaic_0001>

<llo_original>
// kernel: mlp_layer_apply.1
$region0: #{mlp_layer_apply.1}
  #allocation0 [shape = 'u32[]', space=smem, size = 0x4, offset = 0x4, fixed_abs, tag = 'smem constant byte address 0x4 - core index']
  #allocation1 [shape = 'u32[144,128]{1,0:T(1,128)}', space=vmem, size = 0x12000, scoped, tag = 'internal scratch']
  #allocation2 [shape = 'f32[16,128]{1,0:T(8,128)}', space=vmem, size = 0x2000, scoped, tag = 'scratch operand']
  %s0 = inlined_call_operand.hbm [shape: f32[16,32], index: 0, kind: input, shape index: {}]
  %s1 = inlined_call_operand.hbm [shape: bf16[32,128], index: 1, kind: input, shape index: {}]
  %s2 = inlined_call_operand.vmem [shape: f32[1,128], index: 2, kind: input, shape index: {}]
  %s3 = inlined_call_operand.hbm [shape: f32[16,128], index: 3, kind: output, shape index: {}]
  %s4 = sld [smem:[#allocation0]]
  $region38: #{mlp_layer_apply.1} parent=0
    _
  %s6 = ssub.s32 1, %s4
  %s7 = scalar_select 0, %s6, %s4
  $region1: #{mlp_layer_apply.1} parent=0
    #allocation3 [shape = 'u8[8192]{0}', space=vmem, size = 0x2000, scoped, tag = 'input window, operand 0, single buffered']
    #allocation4 [shape = 's32[1]{0}', space=sflag, size = 0x4, scoped, tag = 'scoped memory for mlp_layer_apply.1']
    #allocation5 [shape = 's32[1]{0}', space=sflag, size = 0x4, scoped, tag = 'scoped memory for mlp_layer_apply.1']
    #allocation6 [shape = 'u8[8192]{0}', space=vmem, size = 0x2000, scoped, tag = 'input window, operand 1, single buffered']
    #allocation7 [shape = 's32[1]{0}', space=sflag, size = 0x4, scoped, tag = 'scoped memory for mlp_layer_apply.1']
    #allocation8 [shape = 'u8[8192]{0}', space=vmem, size = 0x2000, scoped, tag = 'output window, operand 0, single buffered']
    %8 = vsyncpa [#allocation4], 0
    %9 = vsyncpa [#allocation7], 0
    %10 = vsyncpa [#allocation5], 0
    // Predicated region
    $region2: #{mlp_layer_apply.1} parent=1 // pred_check
      _
    $region3: #{mlp_layer_apply.1} parent=1 // pred_check_branch
      %12 = sbr.rel (0) target = $region5
    $region4: #{mlp_layer_apply.1} parent=1 // pred_region
      %s14 = ssub.s32 256, 256
      %15 = vsyncadd [#allocation4], %s14
      %s16 = sshll.u32 [#allocation3], 4
      %s17 = int_to_ptr.vmem [resolvable:$true] %s16
      %22 = dma.hbm_to_vmem [thread:$0]  %s0, 256, %s17, [#allocation4], 128, 128, 8
    $region5: #{mlp_layer_apply.1} parent=1 // pred_fallthru
      _
    // Predicated region
    $region6: #{mlp_layer_apply.1} parent=1 // pred_check
      _
    $region7: #{mlp_layer_apply.1} parent=1 // pred_check_branch
      %24 = sbr.rel (0) target = $region9
    $region8: #{mlp_layer_apply.1} parent=1 // pred_region
      %s26 = ssub.s32 256, 256
      %27 = vsyncadd [#allocation7], %s26
      %s28 = sshll.u32 [#allocation6], 4
      %s29 = int_to_ptr.vmem [resolvable:$true] %s28
      %34 = dma.hbm_to_vmem [thread:$0]  %s1, 256, %s29, [#allocation7], 64, 64, 4
    $region9: #{mlp_layer_apply.1} parent=1 // pred_fallthru
      _
    // Predicated region
    $region10: #{mlp_layer_apply.1} parent=1 // pred_check
      _
    $region11: #{mlp_layer_apply.1} parent=1 // pred_check_branch
      %36 = sbr.rel (0) target = $region13
    $region12: #{mlp_layer_apply.1} parent=1 // pred_region
      _
    $region13: #{mlp_layer_apply.1} parent=1 // pred_fallthru
      _
    // Predicated region
    $region14: #{mlp_layer_apply.1} parent=1 // pred_check
      _
    $region15: #{mlp_layer_apply.1} parent=1 // pred_check_branch
      %38 = sbr.rel (0) target = $region17
    $region16: #{mlp_layer_apply.1} parent=1 // pred_region
      %39 = dma.done [#allocation4], 256
    $region17: #{mlp_layer_apply.1} parent=1 // pred_fallthru
      _
    // Predicated region
    $region18: #{mlp_layer_apply.1} parent=1 // pred_check
      _
    $region19: #{mlp_layer_apply.1} parent=1 // pred_check_branch
      %41 = sbr.rel (0) target = $region21
    $region20: #{mlp_layer_apply.1} parent=1 // pred_region
      %42 = dma.done [#allocation7], 256
    $region21: #{mlp_layer_apply.1} parent=1 // pred_fallthru
      _
    %p44 = scmp.eq.s32.totalorder 0, 0
    // Predicated region
    $region22: #{mlp_layer_apply.1} parent=1 // pred_check
      %p45 = pneg %p44
    $region23: #{mlp_layer_apply.1} parent=1 // pred_check_branch
      %47 = sbr.rel (%p45) target = $region25
    $region24: #{mlp_layer_apply.1} parent=1 // pred_region
      %48 = vst [vmem:[#allocation2] sm:$0xff] 0.0
      %49 = vst [vmem:[#allocation2 + $0x8] sm:$0xff] 0.0
    $region25: #{mlp_layer_apply.1} parent=1 // pred_fallthru
      _
    %v50 = vld [vmem:[#allocation2] sm:$0xff]
    %v51 = vld [vmem:[#allocation2 + $0x8] sm:$0xff]
    %v52 = vld [vmem:[#allocation3] sm:$0xff]
    %v53 = vld [vmem:[#allocation3 + $0x8] sm:$0xff]
    %v54 = vpack.c.bf16 %v53, %v52
    %v55 = vld [vmem:[#allocation6] sm:$0xf]
    %v56 = vld [vmem:[#allocation6 + $0x4] sm:$0xf]
    %v57 = vld [vmem:[#allocation6 + $0x8] sm:$0xf]
    %v58 = vld [vmem:[#allocation6 + $0xc] sm:$0xf]
    %v63 = vunpack.c.l.b16 %v55
    %v64 = vunpack.c.l.b16 %v56
    %v65 = vunpack.c.l.b16 %v57
    %v66 = vunpack.c.l.b16 %v58
    %v67 = vpack.c.b16 %v64, %v63
    %v68 = vpack.c.b16 %v66, %v65
    %vm71 = vcmask 261120
    %v73 = vsel %vm71, %v54, 0
    %75 = vmatprep.subr.bf16.mxu0 0
    %76 = vmatpush1.bf16.msra.mxu0 0
    %77 = vmatprep.subr.bf16.mxu0 0
    %78 = vmatpush1.bf16.msra.mxu0 0
    %79 = vmatprep.subr.bf16.mxu0 0
    %80 = vmatpush1.bf16.msra.mxu0 0
    %81 = vmatprep.subr.bf16.mxu0 0
    %82 = vmatpush1.bf16.msra.mxu0 0
    %83 = vmatprep.subr.bf16.mxu0 0
    %84 = vmatpush1.bf16.msra.mxu0 0
    %85 = vmatprep.subr.bf16.mxu0 0
    %86 = vmatpush1.bf16.msra.mxu0 0
    %87 = vmatprep.subr.bf16.mxu0 0
    %88 = vmatpush1.bf16.msra.mxu0 %v68
    %89 = vmatprep.subr.bf16.mxu0 0
    %90 = vmatpush1.bf16.msra.mxu0 %v67
    %91 = vmatprep.subr.bf16.mxu0 0
    %92 = vmatpush2.bf16.msra.mxu0 0
    %93 = vmatprep.subr.bf16.mxu0 0
    %94 = vmatpush2.bf16.msra.mxu0 0
    %95 = vmatprep.subr.bf16.mxu0 0
    %96 = vmatpush2.bf16.msra.mxu0 0
    %97 = vmatprep.subr.bf16.mxu0 0
    %98 = vmatpush2.bf16.msra.mxu0 0
    %99 = vmatprep.subr.bf16.mxu0 0
    %100 = vmatpush2.bf16.msra.mxu0 0
    %101 = vmatprep.subr.bf16.mxu0 0
    %102 = vmatpush2.bf16.msra.mxu0 0
    %103 = vmatprep.subr.bf16.mxu0 0
    %104 = vmatpush2.bf16.msra.mxu0 0
    %105 = vmatprep.subr.bf16.mxu0 0
    %106 = vmatpush2.bf16.msra.mxu0 0
    %107 = vmatprep.mubr.bf16.mxu0 0
    %108 = vmatmul.mubr.bf16.gmra.mxu0 %v73
    %v109 = vpop.f32.mrf.mxu0
    %v110 = vadd.f32 0.0, %v109
    %v111 = vpop.f32.mrf.mxu0
    %v112 = vpop.f32.mrf.mxu0
    %v113 = vadd.f32 0.0, %v112
    %v114 = vpop.f32.mrf.mxu0
    %115 = vdwg.mxu0
    %v116 = vadd.f32 %v50, %v110
    %v117 = vadd.f32 %v51, %v113
    %118 = vst [vmem:[#allocation2] sm:$0xff] %v116
    %119 = vst [vmem:[#allocation2 + $0x8] sm:$0xff] %v117
    // Predicated region
    $region26: #{mlp_layer_apply.1} parent=1 // pred_check
      %p120 = pneg %p44
    $region27: #{mlp_layer_apply.1} parent=1 // pred_check_branch
      %122 = sbr.rel (%p120) target = $region29
    $region28: #{mlp_layer_apply.1} parent=1 // pred_region
      %v123 = vld [vmem:[#allocation2] sm:$0xff]
      %v124 = vld [vmem:[#allocation2 + $0x8] sm:$0xff]
      %v125 = vld [vmem:[%s2] sm:$0x1]
      %v127 = vlaneseq
      %v128 = vshrl.u32 %v127, 7
      %v129 = vsub.s32 0, %v128
      %v130 = vrot.slane %v125, %v129
      %v132 = vadd.f32 %v123, %v130
      %v133 = vadd.f32 %v124, %v130
      %134 = vst [vmem:[#allocation8] sm:$0xff] %v132
      %135 = vst [vmem:[#allocation8 + $0x8] sm:$0xff] %v133
    $region29: #{mlp_layer_apply.1} parent=1 // pred_fallthru
      _
    // Predicated region
    $region30: #{mlp_layer_apply.1} parent=1 // pred_check
      _
    $region31: #{mlp_layer_apply.1} parent=1 // pred_check_branch
      %137 = sbr.rel (0) target = $region33
    $region32: #{mlp_layer_apply.1} parent=1 // pred_region
      %s139 = ssub.s32 256, 256
      %140 = vsyncadd [#allocation5], %s139
      %s141 = sshll.u32 [#allocation8], 4
      %s142 = int_to_ptr.vmem [resolvable:$true] %s141
      %147 = dma.vmem_to_hbm [thread:$0]  %s142, 256, %s3, [#allocation5], 128, 128, 8
    $region33: #{mlp_layer_apply.1} parent=1 // pred_fallthru
      _
    // Predicated region
    $region34: #{mlp_layer_apply.1} parent=1 // pred_check
      _
    $region35: #{mlp_layer_apply.1} parent=1 // pred_check_branch
      %149 = sbr.rel (0) target = $region37
    $region36: #{mlp_layer_apply.1} parent=1 // pred_region
      %150 = dma.done [#allocation5], 256
    $region37: #{mlp_layer_apply.1} parent=1 // pred_fallthru
      _
    %151 = vsyncpa [#allocation4], 1
    %152 = vsyncpa [#allocation7], 1
    %153 = vsyncpa [#allocation5], 1

</llo_original>
